<compile_context>
chip_gen: v7x
topology: tpu7x:2x2x1
jax: 0.10.0
libtpu: 0.0.40
codegen_flags: <defaults>
</compile_context>

<pallas_src>
import jax
import jax.numpy as jnp
from jax.experimental import pallas as pl
from jax.experimental.pallas import tpu as pltpu


def _identity_kernel(x_ref, o_ref):
    # Pure pass-through: the TestNetwork forward has no compute.
    o_ref[...] = x_ref[...]


def identity_copy(x):
    """Minimal-overhead true copy: whole array in one VMEM block, no grid.

    Demo-only.  The module's forward() never calls this (an identity kernel
    is pure overhead); it exists to exercise pallas_call on TPU.
    """
    rows, cols = x.shape
    itemsize = jnp.dtype(x.dtype).itemsize
    return pl.pallas_call(
        _identity_kernel,
        out_shape=jax.ShapeDtypeStruct((rows, cols), x.dtype),
        # No grid: (8, 128) f32 is exactly one (sublane, lane) tile, so a
        # single whole-array VMEM block avoids all pipeline scaffolding.
        in_specs=[pl.BlockSpec(memory_space=pltpu.MemorySpace.VMEM)],
        out_specs=pl.BlockSpec(memory_space=pltpu.MemorySpace.VMEM),
        # True copy into a distinct output buffer: read x (nbytes) + write
        # out (nbytes).  No aliasing -> caller may keep using x afterwards.
        cost_estimate=pl.CostEstimate(
            flops=0,
            transcendentals=0,
            bytes_accessed=2 * rows * cols * itemsize,
        ),
    )(x)


class TestNetwork:
    """JAX/Pallas port of DeepINN.nn.FCNN.TestNetwork (debug / no-op network)."""

    def __init__(self):
        # Original __init__ defines no parameters.
        self.params = {}

    def forward(self, x=None):
        # Faithful to the PyTorch module: debug print, no tensor compute.
        # (Under jax.jit this print would fire only at trace time; this class
        # is a debug network, so the host print is intentional.)
        print(f"Forward pass of {self.__class__.__name__} module.")
        if x is None:
            # Match PyTorch semantics exactly: forward() -> None.
            return None
        # Tensor path: identity.  Kernel elided per perf review — launching a
        # pallas_call here would be pure overhead for a pass-through.
        return x

    __call__ = forward


if __name__ == "__main__":
    key = jax.random.PRNGKey(0)
    # Small dummy activation consistent with a "debug" network: (8, 128) f32
    # — exactly one (sublane, lane) vreg tile, lane-dense last dim.
    x = jax.random.normal(key, (8, 128), dtype=jnp.float32)

    net = TestNetwork()

    # Faithful call (no args -> print + None), as in the PyTorch module.
    none_result = net.forward()
    assert none_result is None

    # Tensor path of the module: identity (no kernel launched).
    y_mod = net.forward(x)
    assert y_mod is x

    # Exercise the Pallas kernel once (standalone demo, true copy, no alias).
    y = identity_copy(x)
    y = jax.block_until_ready(y)
    assert y.shape == x.shape and y.dtype == x.dtype
    assert bool(jnp.allclose(y, x))

    print("KERNEL_OK")
</pallas_src>

<mosaic_0001>
module attributes {stable_mosaic.version = 11 : i64} {
  func.func @_identity_kernel(%arg0: memref<8x128xf32, #tpu.memory_space<vmem>>, %arg1: memref<8x128xf32, #tpu.memory_space<vmem>>) attributes {dimension_semantics = [], scalar_prefetch = 0 : i64, scratch_operands = 0 : i64, tpu.core_type = #tpu.core_type<tc>} {
    %c0 = arith.constant 0 : index
    %c0_0 = arith.constant 0 : index
    %0 = vector.load %arg0[%c0, %c0_0] : memref<8x128xf32, #tpu.memory_space<vmem>>, vector<8x128xf32>
    %c0_1 = arith.constant 0 : index
    %c0_2 = arith.constant 0 : index
    %1 = vector.load %arg1[%c0_1, %c0_2] : memref<8x128xf32, #tpu.memory_space<vmem>>, vector<8x128xf32>
    tpu.vector_store %arg1[%c0_1, %c0_2], %0 {strides = array<i32>} : memref<8x128xf32, #tpu.memory_space<vmem>>, vector<8x128xf32>,
    return
  }
}

</mosaic_0001>

<llo_original>
// kernel: tpu_custom_call.1
$region0: #{tpu_custom_call.1}
  #allocation0 [shape = 'u32[]', space=smem, size = 0x4, offset = 0x4, fixed_abs, tag = 'smem constant byte address 0x4 - core index']
  #allocation1 [shape = 'u32[144,128]{1,0:T(1,128)}', space=vmem, size = 0x12000, scoped, tag = 'internal scratch']
  %s0 = inlined_call_operand.hbm [shape: f32[8,128], index: 0, kind: input, shape index: {}]
  %s1 = inlined_call_operand.hbm [shape: f32[8,128], index: 1, kind: output, shape index: {}]
  %s2 = sld [smem:[#allocation0]]
  $region18: #{tpu_custom_call.1} parent=0
    _
  %s4 = ssub.s32 1, %s2
  %s5 = scalar_select 0, %s4, %s2
  $region1: #{tpu_custom_call.1} parent=0
    #allocation2 [shape = 'u8[4096]{0}', space=vmem, size = 0x1000, scoped, tag = 'input window, operand 0, single buffered']
    #allocation3 [shape = 's32[1]{0}', space=sflag, size = 0x4, scoped, tag = 'scoped memory for tpu_custom_call.1']
    #allocation4 [shape = 's32[1]{0}', space=sflag, size = 0x4, scoped, tag = 'scoped memory for tpu_custom_call.1']
    #allocation5 [shape = 'u8[4096]{0}', space=vmem, size = 0x1000, scoped, tag = 'output window, operand 0, single buffered']
    %6 = vsyncpa [#allocation3], 0
    %7 = vsyncpa [#allocation4], 0
    // Predicated region
    $region2: #{tpu_custom_call.1} parent=1 // pred_check
      _
    $region3: #{tpu_custom_call.1} parent=1 // pred_check_branch
      %9 = sbr.rel (0) target = $region5
    $region4: #{tpu_custom_call.1} parent=1 // pred_region
      %s11 = ssub.s32 128, 128
      %12 = vsyncadd [#allocation3], %s11
      %s14 = sshll.u32 [#allocation2], 4
      %s15 = int_to_ptr.vmem [resolvable:$true] %s14
      %17 = dma.hbm_to_vmem [thread:$0]  %s0, 128, %s15, [#allocation3]
    $region5: #{tpu_custom_call.1} parent=1 // pred_fallthru
      _
    // Predicated region
    $region6: #{tpu_custom_call.1} parent=1 // pred_check
      _
    $region7: #{tpu_custom_call.1} parent=1 // pred_check_branch
      %19 = sbr.rel (0) target = $region9
    $region8: #{tpu_custom_call.1} parent=1 // pred_region
      %20 = dma.done [#allocation3], 128
    $region9: #{tpu_custom_call.1} parent=1 // pred_fallthru
      _
    %v21 = vld [vmem:[#allocation2] sm:$0xff]
    %22 = vst [vmem:[#allocation5] sm:$0xff] %v21
    // Predicated region
    $region10: #{tpu_custom_call.1} parent=1 // pred_check
      _
    $region11: #{tpu_custom_call.1} parent=1 // pred_check_branch
      %24 = sbr.rel (0) target = $region13
    $region12: #{tpu_custom_call.1} parent=1 // pred_region
      %s26 = ssub.s32 128, 128
      %27 = vsyncadd [#allocation4], %s26
      %s29 = sshll.u32 [#allocation5], 4
      %s30 = int_to_ptr.vmem [resolvable:$true] %s29
      %32 = dma.vmem_to_hbm [thread:$0]  %s30, 128, %s1, [#allocation4]
    $region13: #{tpu_custom_call.1} parent=1 // pred_fallthru
      _
    // Predicated region
    $region14: #{tpu_custom_call.1} parent=1 // pred_check
      _
    $region15: #{tpu_custom_call.1} parent=1 // pred_check_branch
      %34 = sbr.rel (0) target = $region17
    $region16: #{tpu_custom_call.1} parent=1 // pred_region
      %35 = dma.done [#allocation4], 128
    $region17: #{tpu_custom_call.1} parent=1 // pred_fallthru
      _
    %36 = vsyncpa [#allocation3], 1
    %37 = vsyncpa [#allocation4], 1

</llo_original>
